<compile_context>
chip_gen: v7x
topology: tpu7x:2x2x1
jax: 0.10.0
libtpu: 0.0.40
codegen_flags: <defaults>
</compile_context>

<pallas_src>
import jax
import jax.numpy as jnp
from jax import lax
from jax.experimental import pallas as pl
from jax.experimental.pallas import tpu as pltpu

LANE = 128  # TPU vreg lane width


def _round_up(n: int, m: int) -> int:
    return ((n + m - 1) // m) * m


def mlp_kernel(x_ref, w1_ref, b1_ref, w2_ref, b2_ref, o_ref):
    """One batch tile of y = relu(x @ w1.T + b1) @ w2.T + b2 (torch-layout weights)."""
    x = x_ref[...]
    # fc1: contract x dim 1 with w1 dim 1 (w1 is (H, I) torch layout — no wrapper transpose).
    h = lax.dot_general(
        x, w1_ref[...],
        dimension_numbers=(((1,), (1,)), ((), ())),
        preferred_element_type=jnp.float32,
    )
    # Bias + ReLU in f32 on the VPU (works on v5e too, which has no bf16 VPU).
    h = jnp.maximum(h + b1_ref[...], 0.0)
    # fc2: contract h dim 1 with w2 dim 1 (w2 is (O, H) torch layout).
    y = lax.dot_general(
        h.astype(w2_ref.dtype), w2_ref[...],
        dimension_numbers=(((1,), (1,)), ((), ())),
        preferred_element_type=jnp.float32,
    )
    o_ref[...] = (y + b2_ref[...]).astype(o_ref.dtype)


def simple_classifier_forward(x, w1, b1, w2, b2, *, block_b=256, use_bf16=False):
    """Forward pass of SimpleClassifier.

    x : (B, input_size)            float32
    w1: (hidden, input)            float32   (torch nn.Linear layout)
    b1: (hidden,)                  float32
    w2: (output, hidden)           float32
    b2: (output,)                  float32
    returns (B, output)            float32
    """
    B, I = x.shape
    H = w1.shape[0]
    O = w2.shape[0]

    # --- lane-dense padding of hidden / output feature dims (zero-pad preserves semantics).
    Hp = _round_up(H, LANE)
    Op = _round_up(O, LANE)
    if Hp != H:
        w1 = jnp.pad(w1, ((0, Hp - H), (0, 0)))
        b1 = jnp.pad(b1, (0, Hp - H))
        w2 = jnp.pad(w2, ((0, 0), (0, Hp - H)))
    if Op != O:
        w2 = jnp.pad(w2, ((0, Op - O), (0, 0)))
        b2 = jnp.pad(b2, (0, Op - O))

    # --- optional bf16 matmul inputs for v6e/v7x MXU (accumulation stays f32 in-kernel).
    if use_bf16:
        x = x.astype(jnp.bfloat16)
        w1 = w1.astype(jnp.bfloat16)
        w2 = w2.astype(jnp.bfloat16)

    b1_r = b1.reshape(1, Hp).astype(jnp.float32)
    b2_r = b2.reshape(1, Op).astype(jnp.float32)

    # --- batch tiling: single tile for small B; grid over batch for large B so both
    #     TensorCores on v7x can split it. Weights stay VMEM-resident across tiles.
    TM = B if B <= block_b else block_b
    Bp = _round_up(B, TM)
    if Bp != B:
        x = jnp.pad(x, ((0, Bp - B), (0, 0)))
    grid_b = Bp // TM

    bpe = jnp.dtype(x.dtype).itemsize
    flops = 2 * Bp * I * Hp + 2 * Bp * Hp * Op
    bytes_accessed = (
        Bp * I * bpe + Hp * I * bpe + Op * Hp * bpe + (Hp + Op) * 4 + Bp * Op * 4
    )

    out = pl.pallas_call(
        mlp_kernel,
        out_shape=jax.ShapeDtypeStruct((Bp, Op), jnp.float32),
        grid_spec=pltpu.PrefetchScalarGridSpec(
            num_scalar_prefetch=0,
            grid=(grid_b,),
            in_specs=[
                pl.BlockSpec((TM, I), lambda i: (i, 0)),   # batch-tiled activations
                pl.BlockSpec((Hp, I), lambda i: (0, 0)),   # fc1 weights, resident in VMEM
                pl.BlockSpec((1, Hp), lambda i: (0, 0)),   # fc1 bias
                pl.BlockSpec((Op, Hp), lambda i: (0, 0)),  # fc2 weights, resident in VMEM
                pl.BlockSpec((1, Op), lambda i: (0, 0)),   # fc2 bias
            ],
            out_specs=pl.BlockSpec((TM, Op), lambda i: (i, 0)),  # lane-dense (Op % 128 == 0)
        ),
        compiler_params=pltpu.CompilerParams(dimension_semantics=("parallel",)),
        cost_estimate=pl.CostEstimate(
            flops=flops, transcendentals=0, bytes_accessed=bytes_accessed
        ),
    )(x, w1, b1_r, w2, b2_r)

    # Slice off batch / output padding.
    return out[:B, :O]


if __name__ == "__main__":
    # Shapes implied by the module: input_size=32, hidden_size=64, output_size=16, batch=8.
    batch, input_size, hidden_size, output_size = 8, 32, 64, 16

    key = jax.random.PRNGKey(0)
    kx, kw1, kb1, kw2, kb2 = jax.random.split(key, 5)

    x = jax.random.normal(kx, (batch, input_size), dtype=jnp.float32)
    # Deterministic synthetic parameters (torch nn.Linear layout).
    w1 = jax.random.normal(kw1, (hidden_size, input_size), dtype=jnp.float32) * 0.1
    b1 = jax.random.normal(kb1, (hidden_size,), dtype=jnp.float32) * 0.1
    w2 = jax.random.normal(kw2, (output_size, hidden_size), dtype=jnp.float32) * 0.1
    b2 = jax.random.normal(kb2, (output_size,), dtype=jnp.float32) * 0.1

    # Plain-JAX reference (same math as the torch forward).
    def ref_fn(xx):
        return jnp.maximum(xx @ w1.T + b1, 0.0) @ w2.T + b2

    # 1) Small-batch path (single tile, grid of 1).
    out = jax.block_until_ready(simple_classifier_forward(x, w1, b1, w2, b2))
    assert out.shape == (batch, output_size)
    assert jnp.allclose(out, ref_fn(x), atol=1e-5, rtol=1e-5)

    # 2) Large-batch path (grid over batch, weights VMEM-resident, "parallel" semantics).
    big_b = 512
    xb = jax.random.normal(kx, (big_b, input_size), dtype=jnp.float32)
    out_b = jax.block_until_ready(
        simple_classifier_forward(xb, w1, b1, w2, b2, block_b=256)
    )
    assert out_b.shape == (big_b, output_size)
    assert jnp.allclose(out_b, ref_fn(xb), atol=1e-5, rtol=1e-5)

    print("KERNEL_OK")
</pallas_src>

<mosaic_0001>
module attributes {stable_mosaic.version = 11 : i64} {
  func.func @mlp_kernel(%arg0: i32, %arg1: memref<8x32xf32, #tpu.memory_space<vmem>>, %arg2: memref<128x32xf32, #tpu.memory_space<vmem>>, %arg3: memref<1x128xf32, #tpu.memory_space<vmem>>, %arg4: memref<128x128xf32, #tpu.memory_space<vmem>>, %arg5: memref<1x128xf32, #tpu.memory_space<vmem>>, %arg6: memref<8x128xf32, #tpu.memory_space<vmem>>) attributes {dimension_semantics = [#tpu.dimension_semantics<parallel>], iteration_bounds = array<i64: 1>, scalar_prefetch = 0 : i64, scratch_operands = 0 : i64, tpu.core_type = #tpu.core_type<tc>, window_params = [{transform_indices = @transform_0, window_bounds = array<i64: 8, 32>}, {pipeline_mode = #tpu.pipeline_mode<synchronous>, transform_indices = @transform_1, window_bounds = array<i64: 128, 32>}, {pipeline_mode = #tpu.pipeline_mode<synchronous>, transform_indices = @transform_2, window_bounds = array<i64: 1, 128>}, {pipeline_mode = #tpu.pipeline_mode<synchronous>, transform_indices = @transform_3, window_bounds = array<i64: 128, 128>}, {pipeline_mode = #tpu.pipeline_mode<synchronous>, transform_indices = @transform_4, window_bounds = array<i64: 1, 128>}, {transform_indices = @transform_5, window_bounds = array<i64: 8, 128>}]} {
    %c0 = arith.constant 0 : index
    %c0_0 = arith.constant 0 : index
    %0 = vector.load %arg1[%c0, %c0_0] : memref<8x32xf32, #tpu.memory_space<vmem>>, vector<8x32xf32>
    %c0_1 = arith.constant 0 : index
    %c0_2 = arith.constant 0 : index
    %1 = vector.load %arg2[%c0_1, %c0_2] : memref<128x32xf32, #tpu.memory_space<vmem>>, vector<128x32xf32>
    %cst = arith.constant dense<0.000000e+00> : vector<8x128xf32>
    %2 = tpu.matmul %0, %1, %cst {dimension_numbers = #tpu.dot_dimension_numbers<[1], [1], [0], [0], [0, 0, 1, 0], [], []>} : vector<8x32xf32>, vector<128x32xf32>, vector<8x128xf32> -> vector<8x128xf32>
    %c0_3 = arith.constant 0 : index
    %c0_4 = arith.constant 0 : index
    %3 = vector.load %arg3[%c0_3, %c0_4] : memref<1x128xf32, #tpu.memory_space<vmem>>, vector<1x128xf32>
    %4 = vector.broadcast %3 : vector<1x128xf32> to vector<8x128xf32>
    %5 = arith.addf %2, %4 : vector<8x128xf32>
    %cst_5 = arith.constant 0.000000e+00 : f32
    %6 = vector.broadcast %cst_5 : f32 to vector<8x128xf32>
    %7 = arith.maximumf %5, %6 : vector<8x128xf32>
    %c0_6 = arith.constant 0 : index
    %c0_7 = arith.constant 0 : index
    %8 = vector.load %arg4[%c0_6, %c0_7] : memref<128x128xf32, #tpu.memory_space<vmem>>, vector<128x128xf32>
    %cst_8 = arith.constant dense<0.000000e+00> : vector<8x128xf32>
    %9 = tpu.matmul %7, %8, %cst_8 {dimension_numbers = #tpu.dot_dimension_numbers<[1], [1], [0], [0], [0, 0, 1, 0], [], []>} : vector<8x128xf32>, vector<128x128xf32>, vector<8x128xf32> -> vector<8x128xf32>
    %c0_9 = arith.constant 0 : index
    %c0_10 = arith.constant 0 : index
    %10 = vector.load %arg5[%c0_9, %c0_10] : memref<1x128xf32, #tpu.memory_space<vmem>>, vector<1x128xf32>
    %11 = vector.broadcast %10 : vector<1x128xf32> to vector<8x128xf32>
    %12 = arith.addf %9, %11 : vector<8x128xf32>
    %c0_11 = arith.constant 0 : index
    %c0_12 = arith.constant 0 : index
    %13 = vector.load %arg6[%c0_11, %c0_12] : memref<8x128xf32, #tpu.memory_space<vmem>>, vector<8x128xf32>
    tpu.vector_store %arg6[%c0_11, %c0_12], %12 {strides = array<i32>} : memref<8x128xf32, #tpu.memory_space<vmem>>, vector<8x128xf32>,
    return
  }
  func.func @transform_0(%arg0: i32) -> (i32, i32) {
    %c0_i32 = arith.constant 0 : i32
    %c0_i32_0 = arith.constant 0 : i32
    return %arg0, %c0_i32 : i32, i32
  }
  func.func @transform_1(%arg0: i32) -> (i32, i32) {
    %c0_i32 = arith.constant 0 : i32
    %c0_i32_0 = arith.constant 0 : i32
    %c0_i32_1 = arith.constant 0 : i32
    return %c0_i32, %c0_i32_0 : i32, i32
  }
  func.func @transform_2(%arg0: i32) -> (i32, i32) {
    %c0_i32 = arith.constant 0 : i32
    %c0_i32_0 = arith.constant 0 : i32
    %c0_i32_1 = arith.constant 0 : i32
    return %c0_i32, %c0_i32_0 : i32, i32
  }
  func.func @transform_3(%arg0: i32) -> (i32, i32) {
    %c0_i32 = arith.constant 0 : i32
    %c0_i32_0 = arith.constant 0 : i32
    %c0_i32_1 = arith.constant 0 : i32
    return %c0_i32, %c0_i32_0 : i32, i32
  }
  func.func @transform_4(%arg0: i32) -> (i32, i32) {
    %c0_i32 = arith.constant 0 : i32
    %c0_i32_0 = arith.constant 0 : i32
    %c0_i32_1 = arith.constant 0 : i32
    return %c0_i32, %c0_i32_0 : i32, i32
  }
  func.func @transform_5(%arg0: i32) -> (i32, i32) {
    %c0_i32 = arith.constant 0 : i32
    %c0_i32_0 = arith.constant 0 : i32
    return %arg0, %c0_i32 : i32, i32
  }
}

</mosaic_0001>

<llo_original>
// kernel: tpu_custom_call.1
$region0: #{tpu_custom_call.1}
  #allocation0 [shape = 'u32[]', space=smem, size = 0x4, offset = 0x4, fixed_abs, tag = 'smem constant byte address 0x4 - core index']
  #allocation1 [shape = 'u32[144,128]{1,0:T(1,128)}', space=vmem, size = 0x12000, scoped, tag = 'internal scratch']
  %s0 = inlined_call_operand.vmem [shape: f32[8,32], index: 0, kind: input, shape index: {}]
  %s1 = inlined_call_operand.vmem [shape: f32[128,32], index: 1, kind: input, shape index: {}]
  %s2 = inlined_call_operand.vmem [shape: f32[1,128], index: 2, kind: input, shape index: {}]
  %s3 = inlined_call_operand.vmem [shape: f32[128,128], index: 3, kind: input, shape index: {}]
  %s4 = inlined_call_operand.vmem [shape: f32[1,128], index: 4, kind: input, shape index: {}]
  %s5 = inlined_call_operand.hbm [shape: f32[8,128], index: 5, kind: output, shape index: {}]
  %s6 = sld [smem:[#allocation0]]
  $region30: #{tpu_custom_call.1} parent=0
    _
  %s8 = ssub.s32 1, %s6
  %s9 = scalar_select 0, %s8, %s6
  $region1: #{tpu_custom_call.1} parent=0
    #allocation2 [shape = 'u8[4096]{0}', space=vmem, size = 0x1000, scoped, tag = 'output window, operand 0, single buffered']
    #allocation3 [shape = 's32[1]{0}', space=sflag, size = 0x4, scoped, tag = 'scoped memory for tpu_custom_call.1']
    %10 = vsyncpa [#allocation3], 0
    // Predicated region
    $region2: #{tpu_custom_call.1} parent=1 // pred_check
      _
    $region3: #{tpu_custom_call.1} parent=1 // pred_check_branch
      %12 = sbr.rel (0) target = $region5
    $region4: #{tpu_custom_call.1} parent=1 // pred_region
      _
    $region5: #{tpu_custom_call.1} parent=1 // pred_fallthru
      _
    // Predicated region
    $region6: #{tpu_custom_call.1} parent=1 // pred_check
      _
    $region7: #{tpu_custom_call.1} parent=1 // pred_check_branch
      %14 = sbr.rel (0) target = $region9
    $region8: #{tpu_custom_call.1} parent=1 // pred_region
      _
    $region9: #{tpu_custom_call.1} parent=1 // pred_fallthru
      _
    // Predicated region
    $region10: #{tpu_custom_call.1} parent=1 // pred_check
      _
    $region11: #{tpu_custom_call.1} parent=1 // pred_check_branch
      %16 = sbr.rel (0) target = $region13
    $region12: #{tpu_custom_call.1} parent=1 // pred_region
      _
    $region13: #{tpu_custom_call.1} parent=1 // pred_fallthru
      _
    // Predicated region
    $region14: #{tpu_custom_call.1} parent=1 // pred_check
      _
    $region15: #{tpu_custom_call.1} parent=1 // pred_check_branch
      %18 = sbr.rel (0) target = $region17
    $region16: #{tpu_custom_call.1} parent=1 // pred_region
      _
    $region17: #{tpu_custom_call.1} parent=1 // pred_fallthru
      _
    // Predicated region
    $region18: #{tpu_custom_call.1} parent=1 // pred_check
      _
    $region19: #{tpu_custom_call.1} parent=1 // pred_check_branch
      %20 = sbr.rel (0) target = $region21
    $region20: #{tpu_custom_call.1} parent=1 // pred_region
      _
    $region21: #{tpu_custom_call.1} parent=1 // pred_fallthru
      _
    %v21 = vld [vmem:[%s0] sm:$0xff]
    %v22 = vld [vmem:[%s1] sm:$0xff]
    %v23 = vld [vmem:[%s1 + $0x8] sm:$0xff]
    %v24 = vld [vmem:[%s1 + $0x10] sm:$0xff]
    %v25 = vld [vmem:[%s1 + $0x18] sm:$0xff]
    %v26 = vld [vmem:[%s1 + $0x20] sm:$0xff]
    %v27 = vld [vmem:[%s1 + $0x28] sm:$0xff]
    %v28 = vld [vmem:[%s1 + $0x30] sm:$0xff]
    %v29 = vld [vmem:[%s1 + $0x38] sm:$0xff]
    %v30 = vld [vmem:[%s1 + $0x40] sm:$0xff]
    %v31 = vld [vmem:[%s1 + $0x48] sm:$0xff]
    %v32 = vld [vmem:[%s1 + $0x50] sm:$0xff]
    %v33 = vld [vmem:[%s1 + $0x58] sm:$0xff]
    %v34 = vld [vmem:[%s1 + $0x60] sm:$0xff]
    %v35 = vld [vmem:[%s1 + $0x68] sm:$0xff]
    %v36 = vld [vmem:[%s1 + $0x70] sm:$0xff]
    %v37 = vld [vmem:[%s1 + $0x78] sm:$0xff]
    %v38 = vld [vmem:[%s2] sm:$0x1]
    %v40 = vlaneseq
    %v41 = vshrl.u32 %v40, 7
    %v42 = vsub.s32 0, %v41
    %v43 = vrot.slane %v38, %v42
    %vm45 = vcmask 261120
    %v47 = vsel %vm45, %v21, 0
    %v50 = vsel %vm45, %v22, 0
    %v53 = vsel %vm45, %v23, 0
    %v56 = vsel %vm45, %v24, 0
    %v59 = vsel %vm45, %v25, 0
    %v62 = vsel %vm45, %v26, 0
    %v65 = vsel %vm45, %v27, 0
    %v68 = vsel %vm45, %v28, 0
    %v71 = vsel %vm45, %v29, 0
    %v74 = vsel %vm45, %v30, 0
    %v77 = vsel %vm45, %v31, 0
    %v80 = vsel %vm45, %v32, 0
    %v83 = vsel %vm45, %v33, 0
    %v86 = vsel %vm45, %v34, 0
    %v89 = vsel %vm45, %v35, 0
    %v92 = vsel %vm45, %v36, 0
    %v95 = vsel %vm45, %v37, 0
    %97 = vmatprep.subr.mxu0 0.0
    %98 = vmatpush1.xpose.msra.mxu0 %v50
    %99 = vmatprep.subr.mxu0 0.0
    %100 = vmatpush1.xpose.msra.mxu0 %v53
    %101 = vmatprep.subr.mxu0 0.0
    %102 = vmatpush1.xpose.msra.mxu0 %v56
    %103 = vmatprep.subr.mxu0 0.0
    %104 = vmatpush1.xpose.msra.mxu0 %v59
    %105 = vmatprep.subr.mxu0 0.0
    %106 = vmatpush1.xpose.msra.mxu0 %v62
    %107 = vmatprep.subr.mxu0 0.0
    %108 = vmatpush1.xpose.msra.mxu0 %v65
    %109 = vmatprep.subr.mxu0 0.0
    %110 = vmatpush1.xpose.msra.mxu0 %v68
    %111 = vmatprep.subr.mxu0 0.0
    %112 = vmatpush1.xpose.msra.mxu0 %v71
    %113 = vmatprep.subr.mxu0 0.0
    %114 = vmatpush1.xpose.msra.mxu0 %v74
    %115 = vmatprep.subr.mxu0 0.0
    %116 = vmatpush1.xpose.msra.mxu0 %v77
    %117 = vmatprep.subr.mxu0 0.0
    %118 = vmatpush1.xpose.msra.mxu0 %v80
    %119 = vmatprep.subr.mxu0 0.0
    %120 = vmatpush1.xpose.msra.mxu0 %v83
    %121 = vmatprep.subr.mxu0 0.0
    %122 = vmatpush1.xpose.msra.mxu0 %v86
    %123 = vmatprep.subr.mxu0 0.0
    %124 = vmatpush1.xpose.msra.mxu0 %v89
    %125 = vmatprep.subr.mxu0 0.0
    %126 = vmatpush1.xpose.msra.mxu0 %v92
    %127 = vmatprep.subr.mxu0 0.0
    %128 = vmatpush1.xpose.msra.mxu0 %v95
    %129 = vmatprep.subr.mxu0 0.0
    %130 = vmatpush1.xpose.msra.mxu0 0.0
    %131 = vmatprep.subr.mxu0 0.0
    %132 = vmatpush1.xpose.msra.mxu0 0.0
    %133 = vmatprep.subr.mxu0 0.0
    %134 = vmatpush1.xpose.msra.mxu0 0.0
    %135 = vmatprep.subr.mxu0 0.0
    %136 = vmatpush1.xpose.msra.mxu0 0.0
    %137 = vmatprep.subr.mxu0 0.0
    %138 = vmatpush1.xpose.msra.mxu0 0.0
    %139 = vmatprep.subr.mxu0 0.0
    %140 = vmatpush1.xpose.msra.mxu0 0.0
    %141 = vmatprep.subr.mxu0 0.0
    %142 = vmatpush1.xpose.msra.mxu0 0.0
    %143 = vmatprep.subr.mxu0 0.0
    %144 = vmatpush1.xpose.msra.mxu0 0.0
    %145 = vmatprep.subr.mxu0 0.0
    %146 = vmatpush1.xpose.msra.mxu0 0.0
    %147 = vmatprep.subr.mxu0 0.0
    %148 = vmatpush1.xpose.msra.mxu0 0.0
    %149 = vmatprep.subr.mxu0 0.0
    %150 = vmatpush1.xpose.msra.mxu0 0.0
    %151 = vmatprep.subr.mxu0 0.0
    %152 = vmatpush1.xpose.msra.mxu0 0.0
    %153 = vmatprep.subr.mxu0 0.0
    %154 = vmatpush1.xpose.msra.mxu0 0.0
    %155 = vmatprep.subr.mxu0 0.0
    %156 = vmatpush1.xpose.msra.mxu0 0.0
    %157 = vmatprep.subr.mxu0 0.0
    %158 = vmatpush1.xpose.msra.mxu0 0.0
    %159 = vmatprep.subr.mxu0 0.0
    %160 = vmatpush1.xpose.msra.mxu0 0.0
    %161 = vmatprep.mubr.f32.mxu0 0.0
    %162 = vmatmul.mubr.f32.gmra.mrb[0].mxu0 %v47
    %v163 = vpop.f32.mrb[0].mxu0
    %v164 = vadd.f32 %v43, %v163
    %v165 = vpop.f32.mrb[0].mxu0
    %166 = vdwg.mxu0
    %v167 = vmax.f32 %v164, 0.0
    %v168 = vld [vmem:[%s3] sm:$0xff]
    %v169 = vld [vmem:[%s3 + $0x8] sm:$0xff]
    %v170 = vld [vmem:[%s3 + $0x10] sm:$0xff]
    %v171 = vld [vmem:[%s3 + $0x18] sm:$0xff]
    %v172 = vld [vmem:[%s3 + $0x20] sm:$0xff]
    %v173 = vld [vmem:[%s3 + $0x28] sm:$0xff]
    %v174 = vld [vmem:[%s3 + $0x30] sm:$0xff]
    %v175 = vld [vmem:[%s3 + $0x38] sm:$0xff]
    %v176 = vld [vmem:[%s3 + $0x40] sm:$0xff]
    %v177 = vld [vmem:[%s3 + $0x48] sm:$0xff]
    %v178 = vld [vmem:[%s3 + $0x50] sm:$0xff]
    %v179 = vld [vmem:[%s3 + $0x58] sm:$0xff]
    %v180 = vld [vmem:[%s3 + $0x60] sm:$0xff]
    %v181 = vld [vmem:[%s3 + $0x68] sm:$0xff]
    %v182 = vld [vmem:[%s3 + $0x70] sm:$0xff]
    %v183 = vld [vmem:[%s3 + $0x78] sm:$0xff]
    %v184 = vld [vmem:[%s4] sm:$0x1]
    %v186 = vlaneseq
    %v187 = vshrl.u32 %v186, 7
    %v188 = vsub.s32 0, %v187
    %v189 = vrot.slane %v184, %v188
    %191 = vmatprep.subr.mxu0 0.0
    %192 = vmatpush1.xpose.msra.mxu0 %v168
    %193 = vmatprep.subr.mxu0 0.0
    %194 = vmatpush1.xpose.msra.mxu0 %v169
    %195 = vmatprep.subr.mxu0 0.0
    %196 = vmatpush1.xpose.msra.mxu0 %v170
    %197 = vmatprep.subr.mxu0 0.0
    %198 = vmatpush1.xpose.msra.mxu0 %v171
    %199 = vmatprep.subr.mxu0 0.0
    %200 = vmatpush1.xpose.msra.mxu0 %v172
    %201 = vmatprep.subr.mxu0 0.0
    %202 = vmatpush1.xpose.msra.mxu0 %v173
    %203 = vmatprep.subr.mxu0 0.0
    %204 = vmatpush1.xpose.msra.mxu0 %v174
    %205 = vmatprep.subr.mxu0 0.0
    %206 = vmatpush1.xpose.msra.mxu0 %v175
    %207 = vmatprep.subr.mxu0 0.0
    %208 = vmatpush1.xpose.msra.mxu0 %v176
    %209 = vmatprep.subr.mxu0 0.0
    %210 = vmatpush1.xpose.msra.mxu0 %v177
    %211 = vmatprep.subr.mxu0 0.0
    %212 = vmatpush1.xpose.msra.mxu0 %v178
    %213 = vmatprep.subr.mxu0 0.0
    %214 = vmatpush1.xpose.msra.mxu0 %v179
    %215 = vmatprep.subr.mxu0 0.0
    %216 = vmatpush1.xpose.msra.mxu0 %v180
    %217 = vmatprep.subr.mxu0 0.0
    %218 = vmatpush1.xpose.msra.mxu0 %v181
    %219 = vmatprep.subr.mxu0 0.0
    %220 = vmatpush1.xpose.msra.mxu0 %v182
    %221 = vmatprep.subr.mxu0 0.0
    %222 = vmatpush1.xpose.msra.mxu0 %v183
    %223 = vmatprep.subr.mxu0 0.0
    %224 = vmatpush1.xpose.msra.mxu0 0.0
    %225 = vmatprep.subr.mxu0 0.0
    %226 = vmatpush1.xpose.msra.mxu0 0.0
    %227 = vmatprep.subr.mxu0 0.0
    %228 = vmatpush1.xpose.msra.mxu0 0.0
    %229 = vmatprep.subr.mxu0 0.0
    %230 = vmatpush1.xpose.msra.mxu0 0.0
    %231 = vmatprep.subr.mxu0 0.0
    %232 = vmatpush1.xpose.msra.mxu0 0.0
    %233 = vmatprep.subr.mxu0 0.0
    %234 = vmatpush1.xpose.msra.mxu0 0.0
    %235 = vmatprep.subr.mxu0 0.0
    %236 = vmatpush1.xpose.msra.mxu0 0.0
    %237 = vmatprep.subr.mxu0 0.0
    %238 = vmatpush1.xpose.msra.mxu0 0.0
    %239 = vmatprep.subr.mxu0 0.0
    %240 = vmatpush1.xpose.msra.mxu0 0.0
    %241 = vmatprep.subr.mxu0 0.0
    %242 = vmatpush1.xpose.msra.mxu0 0.0
    %243 = vmatprep.subr.mxu0 0.0
    %244 = vmatpush1.xpose.msra.mxu0 0.0
    %245 = vmatprep.subr.mxu0 0.0
    %246 = vmatpush1.xpose.msra.mxu0 0.0
    %247 = vmatprep.subr.mxu0 0.0
    %248 = vmatpush1.xpose.msra.mxu0 0.0
    %249 = vmatprep.subr.mxu0 0.0
    %250 = vmatpush1.xpose.msra.mxu0 0.0
    %251 = vmatprep.subr.mxu0 0.0
    %252 = vmatpush1.xpose.msra.mxu0 0.0
    %253 = vmatprep.subr.mxu0 0.0
    %254 = vmatpush1.xpose.msra.mxu0 0.0
    %255 = vmatprep.mubr.f32.mxu0 0.0
    %256 = vmatmul.mubr.f32.gmra.mrb[0].mxu0 %v167
    %v257 = vpop.f32.mrb[0].mxu0
    %v258 = vadd.f32 %v189, %v257
    %v259 = vpop.f32.mrb[0].mxu0
    %260 = vdwg.mxu0
    %261 = vst [vmem:[#allocation2] sm:$0xff] %v258
    // Predicated region
    $region22: #{tpu_custom_call.1} parent=1 // pred_check
      _
    $region23: #{tpu_custom_call.1} parent=1 // pred_check_branch
      %263 = sbr.rel (0) target = $region25
    $region24: #{tpu_custom_call.1} parent=1 // pred_region
      %s265 = ssub.s32 128, 128
      %266 = vsyncadd [#allocation3], %s265
      %s268 = sshll.u32 [#allocation2], 4
      %s269 = int_to_ptr.vmem [resolvable:$true] %s268
      %271 = dma.vmem_to_hbm [thread:$0]  %s269, 128, %s5, [#allocation3]
    $region25: #{tpu_custom_call.1} parent=1 // pred_fallthru
      _
    // Predicated region
    $region26: #{tpu_custom_call.1} parent=1 // pred_check
      _
    $region27: #{tpu_custom_call.1} parent=1 // pred_check_branch
      %273 = sbr.rel (0) target = $region29
    $region28: #{tpu_custom_call.1} parent=1 // pred_region
      %274 = dma.done [#allocation3], 128
    $region29: #{tpu_custom_call.1} parent=1 // pred_fallthru
      _
    %275 = vsyncpa [#allocation3], 1

</llo_original>
